<compile_context>
chip_gen: v7x
topology: tpu7x:2x2x1
jax: 0.10.0
libtpu: 0.0.40
codegen_flags: <defaults>
</compile_context>

<pallas_src>
import math
from functools import lru_cache, partial

import numpy as np

import jax
import jax.numpy as jnp
from jax.experimental import pallas as pl
from jax.experimental.pallas import tpu as pltpu


# --------------------------------------------------------------------------
# helpers
# --------------------------------------------------------------------------
def _round_up(x: int, m: int) -> int:
    return ((x + m - 1) // m) * m


def _pick_tn(l_out: int) -> int:
    """Output-column (lane) tile: 128 or 256."""
    pad256 = _round_up(l_out, 256)
    pad128 = _round_up(l_out, 128)
    # Same padded footprint and still >= 2 parallel column tiles -> fewer,
    # larger grid steps; otherwise 128 (less padding / keeps v7x's 2 TCs fed).
    if pad256 == pad128 and pad256 // 256 >= 2:
        return 256
    return 128


def _pick_bk(l_in: int) -> int:
    """Source (contraction) block: 128 for short signals, 256 for long."""
    return 256 if l_in > 1024 else 128


@lru_cache(maxsize=64)
def _interp_plan(l_in: int, l_out: int, tn: int, bk: int):
    """Host-side (numpy, float64) interpolation plan.

    Returns:
      kb        : (n_col_tiles,) int32 source-block offset per output tile
      lo_rel    : (l_out_pad,)   int32 window-relative low-tap index per column
      frac      : (l_out_pad,)   f32   high-tap weight per column
      nk        : number of bk-wide source blocks per output tile
      k_pad     : padded source length the kernel reads
      l_out_pad : padded (lane-dense) output length
    """
    if l_out == 1:
        src = np.zeros((1,), np.float64)
    else:
        src = np.arange(l_out, dtype=np.float64) * ((l_in - 1) / (l_out - 1))
    lo = np.clip(np.floor(src).astype(np.int64), 0, l_in - 1)
    hi = np.clip(lo + 1, 0, l_in - 1)
    frac = (src - lo).astype(np.float32)

    l_out_pad = _round_up(l_out, tn)
    n_col_tiles = l_out_pad // tn

    kb = np.zeros((n_col_tiles,), np.int64)
    last = np.zeros((n_col_tiles,), np.int64)
    for j in range(n_col_tiles):
        c0 = j * tn
        c1 = min((j + 1) * tn, l_out)      # exclusive; every tile has >=1 real column
        kb[j] = lo[c0] // bk               # lo/hi are monotone in c
        last[j] = hi[c1 - 1] // bk
    nk = int(np.max(last - kb)) + 1
    k_pad = (int(np.max(kb)) + nk) * bk

    lo_rel = np.zeros((l_out_pad,), np.int64)
    frac_pad = np.zeros((l_out_pad,), np.float32)
    cols = np.arange(l_out)
    lo_rel[:l_out] = lo - kb[cols // tn] * bk
    frac_pad[:l_out] = frac
    return (kb.astype(np.int32), lo_rel.astype(np.int32), frac_pad,
            nk, k_pad, l_out_pad)


# device-resident plan cache: avoids re-uploading plan arrays every call
_DEVICE_PLAN_CACHE = {}


def _device_plan(l_in: int, l_out: int, tn: int, bk: int):
    key = (l_in, l_out, tn, bk)
    hit = _DEVICE_PLAN_CACHE.get(key)
    if hit is None:
        kb, lo_rel, frac, nk, k_pad, l_out_pad = _interp_plan(l_in, l_out, tn, bk)
        hit = (jnp.asarray(kb),                      # (n_col_tiles,) int32 (SMEM prefetch)
               jnp.asarray(lo_rel.reshape(1, -1)),   # (1, l_out_pad) int32
               jnp.asarray(frac.reshape(1, -1)),     # (1, l_out_pad) f32
               nk, k_pad, l_out_pad)
        _DEVICE_PLAN_CACHE[key] = hit
    return hit


# --------------------------------------------------------------------------
# kernels
# --------------------------------------------------------------------------
def _block_weights(lo_ref, fr_ref, k_block, bk, tn, dtype):
    """Generate the (bk, tn) two-tap linear-interp weight block on the VPU."""
    lo = lo_ref[...]                                        # (1, tn) int32, window-relative
    fr = fr_ref[...]                                        # (1, tn) f32
    r = jax.lax.broadcasted_iota(jnp.int32, (bk, tn), 0) + k_block * bk
    w = jnp.where(r == lo, 1.0 - fr, 0.0) + jnp.where(r == lo + 1, fr, 0.0)
    return w.astype(dtype)


def _resample_kernel_nk1(kb_ref, x_ref, lo_ref, fr_ref, o_ref, *, bk, tn):
    # Single source block per output tile: no reduction axis, no scratch.
    del kb_ref  # only used by the index_map
    w = _block_weights(lo_ref, fr_ref, 0, bk, tn, x_ref.dtype)
    o_ref[...] = jnp.dot(
        x_ref[...], w, preferred_element_type=jnp.float32).astype(o_ref.dtype)


def _resample_kernel(kb_ref, x_ref, lo_ref, fr_ref, o_ref, acc_ref, *, bk, tn):
    del kb_ref  # only used by the index_map
    k = pl.program_id(2)

    @pl.when(k == 0)
    def _():
        acc_ref[...] = jnp.zeros_like(acc_ref)

    w = _block_weights(lo_ref, fr_ref, k, bk, tn, x_ref.dtype)
    acc_ref[...] += jnp.dot(x_ref[...], w, preferred_element_type=jnp.float32)

    @pl.when(k == pl.num_programs(2) - 1)
    def _():
        o_ref[...] = acc_ref[...].astype(o_ref.dtype)


# --------------------------------------------------------------------------
# wrapper
# --------------------------------------------------------------------------
def resample(sig, fs=None, dst_fs=None, siglen=None):
    """Pure-functional equivalent of torch_ecg `resample_t` (linear mode)."""
    assert (fs is not None) ^ (siglen is not None), \
        "one and only one of `fs` and `siglen` should be set"
    l_in = int(sig.shape[-1])
    if siglen is not None:
        l_out = int(siglen)
    else:
        assert dst_fs is not None, "if `fs` is set, `dst_fs` should also be set"
        l_out = int(math.floor(l_in * (dst_fs / fs)))

    lead_shape = sig.shape[:-1]
    out_dtype = sig.dtype
    compute_dtype = jnp.bfloat16 if sig.dtype == jnp.bfloat16 else jnp.float32

    # ---- tile sizes -------------------------------------------------------
    tn = _pick_tn(l_out)                        # output-column (lane) tile
    bk = _pick_bk(l_in)                         # source (contraction) block
    row_align = 16 if compute_dtype == jnp.bfloat16 else 8
    n = int(np.prod(lead_shape)) if lead_shape else 1
    tm = min(512, _round_up(max(n, 1), row_align))

    kb, lo_rel, frac, nk, k_pad, l_out_pad = _device_plan(l_in, l_out, tn, bk)

    # ---- prepare the signal -----------------------------------------------
    x2d = sig.reshape(-1, l_in).astype(compute_dtype)
    if k_pad < l_in:                            # unused source tail (heavy downsample)
        x2d = x2d[:, :k_pad]
    row_pad = (-n) % tm
    col_pad = k_pad - x2d.shape[-1]
    if row_pad or col_pad:
        x2d = jnp.pad(x2d, ((0, row_pad), (0, col_pad)))
    n_pad = n + row_pad

    n_row_tiles = n_pad // tm
    n_col_tiles = l_out_pad // tn

    if nk == 1:
        kernel = partial(_resample_kernel_nk1, bk=bk, tn=tn)
        grid_spec = pltpu.PrefetchScalarGridSpec(
            num_scalar_prefetch=1,
            grid=(n_row_tiles, n_col_tiles),
            in_specs=[
                pl.BlockSpec((tm, bk), lambda i, j, kb_ref: (i, kb_ref[j])),
                pl.BlockSpec((1, tn), lambda i, j, kb_ref: (0, j)),
                pl.BlockSpec((1, tn), lambda i, j, kb_ref: (0, j)),
            ],
            out_specs=pl.BlockSpec((tm, tn), lambda i, j, kb_ref: (i, j)),
        )
        dim_sem = ("parallel", "parallel")
    else:
        kernel = partial(_resample_kernel, bk=bk, tn=tn)
        grid_spec = pltpu.PrefetchScalarGridSpec(
            num_scalar_prefetch=1,
            grid=(n_row_tiles, n_col_tiles, nk),
            in_specs=[
                # x: row tile i, source-window block kb[j] + k
                pl.BlockSpec((tm, bk), lambda i, j, k, kb_ref: (i, kb_ref[j] + k)),
                pl.BlockSpec((1, tn), lambda i, j, k, kb_ref: (0, j)),
                pl.BlockSpec((1, tn), lambda i, j, k, kb_ref: (0, j)),
            ],
            out_specs=pl.BlockSpec((tm, tn), lambda i, j, k, kb_ref: (i, j)),
            scratch_shapes=[pltpu.VMEM((tm, tn), jnp.float32)],
        )
        dim_sem = ("parallel", "parallel", "arbitrary")

    out2d = pl.pallas_call(
        kernel,
        out_shape=jax.ShapeDtypeStruct((n_pad, l_out_pad), out_dtype),
        grid_spec=grid_spec,
        compiler_params=pltpu.CompilerParams(dimension_semantics=dim_sem),
    )(kb, x2d, lo_rel, frac)

    out2d = out2d[:n, :l_out]
    return out2d.reshape(*lead_shape, l_out)


class Resample:
    """JAX/Pallas counterpart of torch_ecg.preprocessors.Resample."""

    def __init__(self, fs=None, dst_fs=None, siglen=None, inplace=False, **kwargs):
        self.fs = fs
        self.dst_fs = dst_fs
        self.siglen = siglen
        self.inplace = inplace  # no-op: JAX arrays are immutable
        assert (self.fs is not None) ^ (self.siglen is not None), \
            "one and only one of `fs` and `siglen` should be set"
        if self.dst_fs is not None:
            assert self.fs is not None, "if `dst_fs` is set, `fs` should also be set"
            self.scale_factor = self.dst_fs / self.fs

    def __call__(self, sig):
        return resample(sig, fs=self.fs, dst_fs=self.dst_fs, siglen=self.siglen)


# --------------------------------------------------------------------------
# reference & self-test
# --------------------------------------------------------------------------
def _reference_linear_resize(sig, l_out):
    """Pure-jnp reference: linear interp along last axis, align_corners=True."""
    l_in = sig.shape[-1]
    src = jnp.arange(l_out, dtype=jnp.float32) * ((l_in - 1) / max(l_out - 1, 1))
    lo = jnp.clip(jnp.floor(src).astype(jnp.int32), 0, l_in - 1)
    hi = jnp.clip(lo + 1, 0, l_in - 1)
    frac = src - lo.astype(jnp.float32)
    x_lo = jnp.take(sig, lo, axis=-1)
    x_hi = jnp.take(sig, hi, axis=-1)
    return x_lo * (1.0 - frac) + x_hi * frac


if __name__ == "__main__":
    key = jax.random.PRNGKey(0)
    # (batch=2, n_leads=4, siglen=16), source fs=16 Hz resampled to 32 Hz.
    sig = jax.random.normal(key, (2, 4, 16), dtype=jnp.float32)

    mod = Resample(fs=16, dst_fs=32)            # scale_factor = 2.0 -> L_out = 32
    out = jax.block_until_ready(mod(sig))
    assert out.shape == (2, 4, 32), out.shape
    assert out.dtype == sig.dtype
    ref = _reference_linear_resize(sig, 32)
    assert jnp.allclose(out, ref, atol=1e-5, rtol=1e-5)

    # also exercise the `siglen` branch (downsample to 8 samples)
    mod2 = Resample(siglen=8)
    out2 = jax.block_until_ready(mod2(sig))
    assert out2.shape == (2, 4, 8)
    assert jnp.allclose(out2, _reference_linear_resize(sig, 8), atol=1e-5, rtol=1e-5)

    # bf16 path: bf16 MXU inputs / bf16 output written in-kernel
    sig_bf16 = sig.astype(jnp.bfloat16)
    out3 = jax.block_until_ready(Resample(fs=16, dst_fs=32)(sig_bf16))
    assert out3.shape == (2, 4, 32) and out3.dtype == jnp.bfloat16
    ref3 = _reference_linear_resize(sig_bf16.astype(jnp.float32), 32)
    assert jnp.allclose(out3.astype(jnp.float32), ref3, atol=5e-2, rtol=5e-2)

    # heavier downsample (512 -> 64) to exercise the nk > 1 reduction path
    sig_ds = jax.random.normal(jax.random.PRNGKey(0), (2, 4, 512), dtype=jnp.float32)
    out4 = jax.block_until_ready(Resample(siglen=64)(sig_ds))
    assert out4.shape == (2, 4, 64)
    ref4 = _reference_linear_resize(sig_ds, 64)
    # (reference computes src positions in f32, the kernel plan in f64)
    assert jnp.allclose(out4, ref4, atol=1e-3, rtol=1e-3)

    print("KERNEL_OK")
</pallas_src>

<mosaic_0001>
module attributes {stable_mosaic.version = 11 : i64} {
  func.func @_resample_kernel_nk1(%arg0: i32, %arg1: i32, %arg2: memref<1xi32, #tpu.memory_space<smem>>, %arg3: memref<8x128xf32, #tpu.memory_space<vmem>>, %arg4: memref<1x128xi32, #tpu.memory_space<vmem>>, %arg5: memref<1x128xf32, #tpu.memory_space<vmem>>, %arg6: memref<8x128xf32, #tpu.memory_space<vmem>>) attributes {dimension_semantics = [#tpu.dimension_semantics<parallel>, #tpu.dimension_semantics<parallel>], iteration_bounds = array<i64: 1, 1>, scalar_prefetch = 1 : i64, scratch_operands = 0 : i64, tpu.core_type = #tpu.core_type<tc>, window_params = [{transform_indices = @transform_0, window_bounds = array<i64: 8, 128>}, {transform_indices = @transform_1, window_bounds = array<i64: 1, 128>}, {transform_indices = @transform_2, window_bounds = array<i64: 1, 128>}, {transform_indices = @transform_3, window_bounds = array<i64: 8, 128>}]} {
    %c0 = arith.constant 0 : index
    %c0_0 = arith.constant 0 : index
    %0 = vector.load %arg4[%c0, %c0_0] : memref<1x128xi32, #tpu.memory_space<vmem>>, vector<1x128xi32>
    %c0_1 = arith.constant 0 : index
    %c0_2 = arith.constant 0 : index
    %1 = vector.load %arg5[%c0_1, %c0_2] : memref<1x128xf32, #tpu.memory_space<vmem>>, vector<1x128xf32>
    %2 = tpu.iota {dimensions = array<i32: 0>} : vector<128x128xi32>
    %c0_i32 = arith.constant 0 : i32
    %3 = vector.broadcast %c0_i32 : i32 to vector<128x128xi32>
    %4 = arith.addi %2, %3 : vector<128x128xi32>
    %5 = vector.broadcast %0 : vector<1x128xi32> to vector<128x128xi32>
    %6 = arith.cmpi eq, %4, %5 : vector<128x128xi32>
    %cst = arith.constant 1.000000e+00 : f32
    %7 = vector.broadcast %cst : f32 to vector<1x128xf32>
    %8 = arith.subf %7, %1 : vector<1x128xf32>
    %cst_3 = arith.constant 0.000000e+00 : f32
    %9 = vector.shape_cast %8 : vector<1x128xf32> to vector<1x128xf32>
    %10 = vector.broadcast %9 : vector<1x128xf32> to vector<128x128xf32>
    %11 = vector.broadcast %cst_3 : f32 to vector<128x128xf32>
    %12 = arith.select %6, %10, %11 : vector<128x128xi1>, vector<128x128xf32>
    %c1_i32 = arith.constant 1 : i32
    %13 = vector.broadcast %c1_i32 : i32 to vector<1x128xi32>
    %14 = arith.addi %0, %13 : vector<1x128xi32>
    %15 = vector.broadcast %14 : vector<1x128xi32> to vector<128x128xi32>
    %16 = arith.cmpi eq, %4, %15 : vector<128x128xi32>
    %cst_4 = arith.constant 0.000000e+00 : f32
    %17 = vector.shape_cast %1 : vector<1x128xf32> to vector<1x128xf32>
    %18 = vector.broadcast %17 : vector<1x128xf32> to vector<128x128xf32>
    %19 = vector.broadcast %cst_4 : f32 to vector<128x128xf32>
    %20 = arith.select %16, %18, %19 : vector<128x128xi1>, vector<128x128xf32>
    %21 = arith.addf %12, %20 : vector<128x128xf32>
    %c0_5 = arith.constant 0 : index
    %c0_6 = arith.constant 0 : index
    %22 = vector.load %arg3[%c0_5, %c0_6] : memref<8x128xf32, #tpu.memory_space<vmem>>, vector<8x128xf32>
    %cst_7 = arith.constant dense<0.000000e+00> : vector<8x128xf32>
    %23 = tpu.matmul %22, %21, %cst_7 {dimension_numbers = #tpu.dot_dimension_numbers<[1], [0], [0], [1], [0, 0, 1, 1], [], []>} : vector<8x128xf32>, vector<128x128xf32>, vector<8x128xf32> -> vector<8x128xf32>
    %c0_8 = arith.constant 0 : index
    %c0_9 = arith.constant 0 : index
    %24 = vector.load %arg6[%c0_8, %c0_9] : memref<8x128xf32, #tpu.memory_space<vmem>>, vector<8x128xf32>
    tpu.vector_store %arg6[%c0_8, %c0_9], %23 {strides = array<i32>} : memref<8x128xf32, #tpu.memory_space<vmem>>, vector<8x128xf32>,
    return
  }
  func.func @transform_0(%arg0: i32, %arg1: i32, %arg2: memref<1xi32, #tpu.memory_space<smem>>) -> (i32, i32) {
    %0 = arith.index_cast %arg1 : i32 to index
    %1 = memref.load %arg2[%0] : memref<1xi32, #tpu.memory_space<smem>>
    %c0_i32 = arith.constant 0 : i32
    return %arg0, %1 : i32, i32
  }
  func.func @transform_1(%arg0: i32, %arg1: i32, %arg2: memref<1xi32, #tpu.memory_space<smem>>) -> (i32, i32) {
    %c0_i32 = arith.constant 0 : i32
    %c0_i32_0 = arith.constant 0 : i32
    return %c0_i32, %arg1 : i32, i32
  }
  func.func @transform_2(%arg0: i32, %arg1: i32, %arg2: memref<1xi32, #tpu.memory_space<smem>>) -> (i32, i32) {
    %c0_i32 = arith.constant 0 : i32
    %c0_i32_0 = arith.constant 0 : i32
    return %c0_i32, %arg1 : i32, i32
  }
  func.func @transform_3(%arg0: i32, %arg1: i32, %arg2: memref<1xi32, #tpu.memory_space<smem>>) -> (i32, i32) {
    %c0_i32 = arith.constant 0 : i32
    return %arg0, %arg1 : i32, i32
  }
}

</mosaic_0001>

<llo_original>
// kernel: tpu_custom_call.1
$region0: #{tpu_custom_call.1}
  #allocation0 [shape = 'u32[]', space=smem, size = 0x4, offset = 0x4, fixed_abs, tag = 'smem constant byte address 0x4 - core index']
  #allocation1 [shape = 'u32[144,128]{1,0:T(1,128)}', space=vmem, size = 0x12000, scoped, tag = 'internal scratch']
  #allocation2 [shape = 's32[1]{0}', space=sflag, size = 0x4, scoped, tag = 'scoped memory for tpu_custom_call.1']
  #allocation3 [shape = 's32[1]{0:T(128)S(6)}', space=smem, size = 0x200, scoped, tag = 'prefetched SMEM operand 0']
  %s0 = inlined_call_operand.<no memory space> [shape: s32[1], index: 0, kind: input, shape index: {}]
  %s1 = inlined_call_operand.hbm [shape: f32[8,128], index: 1, kind: input, shape index: {}]
  %s2 = inlined_call_operand.vmem [shape: s32[1,128], index: 2, kind: input, shape index: {}]
  %s3 = inlined_call_operand.vmem [shape: f32[1,128], index: 3, kind: input, shape index: {}]
  %s4 = inlined_call_operand.hbm [shape: f32[8,128], index: 4, kind: output, shape index: {}]
  %s5 = sld [smem:[#allocation0]]
  $region26: #{tpu_custom_call.1} parent=0
    _
  %s7 = ssub.s32 1, %s5
  %s8 = scalar_select 0, %s7, %s5
  %9 = sst [smem:[#allocation3]] %s0
  $region1: #{tpu_custom_call.1} parent=0
    #allocation4 [shape = 'u8[4096]{0}', space=vmem, size = 0x1000, scoped, tag = 'input window, operand 1, single buffered']
    #allocation5 [shape = 's32[1]{0}', space=sflag, size = 0x4, scoped, tag = 'scoped memory for tpu_custom_call.1']
    #allocation6 [shape = 's32[1]{0}', space=sflag, size = 0x4, scoped, tag = 'scoped memory for tpu_custom_call.1']
    #allocation7 [shape = 'u8[4096]{0}', space=vmem, size = 0x1000, scoped, tag = 'output window, operand 0, single buffered']
    %10 = vsyncpa [#allocation5], 0
    %11 = vsyncpa [#allocation6], 0
    // Predicated region
    $region2: #{tpu_custom_call.1} parent=1 // pred_check
      _
    $region3: #{tpu_custom_call.1} parent=1 // pred_check_branch
      %13 = sbr.rel (0) target = $region5
    $region4: #{tpu_custom_call.1} parent=1 // pred_region
      %s14 = sld [smem:[#allocation3]]
      %s16 = ssub.s32 128, 128
      %17 = vsyncadd [#allocation5], %s16
      %s18 = smul.addr %s14, 128
      %s19 = scalar_lea.hbm %s1, %s18
      %s21 = sshll.u32 [#allocation4], 4
      %s22 = int_to_ptr.vmem [resolvable:$true] %s21
      %24 = dma.hbm_to_vmem [thread:$0]  %s19, 128, %s22, [#allocation5]
    $region5: #{tpu_custom_call.1} parent=1 // pred_fallthru
      _
    // Predicated region
    $region6: #{tpu_custom_call.1} parent=1 // pred_check
      _
    $region7: #{tpu_custom_call.1} parent=1 // pred_check_branch
      %26 = sbr.rel (0) target = $region9
    $region8: #{tpu_custom_call.1} parent=1 // pred_region
      _
    $region9: #{tpu_custom_call.1} parent=1 // pred_fallthru
      _
    // Predicated region
    $region10: #{tpu_custom_call.1} parent=1 // pred_check
      _
    $region11: #{tpu_custom_call.1} parent=1 // pred_check_branch
      %28 = sbr.rel (0) target = $region13
    $region12: #{tpu_custom_call.1} parent=1 // pred_region
      _
    $region13: #{tpu_custom_call.1} parent=1 // pred_fallthru
      _
    // Predicated region
    $region14: #{tpu_custom_call.1} parent=1 // pred_check
      _
    $region15: #{tpu_custom_call.1} parent=1 // pred_check_branch
      %30 = sbr.rel (0) target = $region17
    $region16: #{tpu_custom_call.1} parent=1 // pred_region
      %31 = dma.done [#allocation5], 128
    $region17: #{tpu_custom_call.1} parent=1 // pred_fallthru
      _
    %s32 = sld [smem:[#allocation3]]
    %v33 = vld [vmem:[%s2] sm:$0x1]
    %v34 = vld [vmem:[%s3] sm:$0x1]
    %v35 = vlaneseq
    %v36 = vshrl.u32 %v35, 7
    %v37 = vadd.s32 %v36, 8
    %v38 = vadd.s32 %v36, 16
    %v39 = vadd.s32 %v36, 24
    %v40 = vadd.s32 %v36, 32
    %v41 = vadd.s32 %v36, 40
    %v42 = vadd.s32 %v36, 48
    %v43 = vadd.s32 %v36, 56
    %v44 = vadd.s32 %v36, 64
    %v45 = vadd.s32 %v36, 72
    %v46 = vadd.s32 %v36, 80
    %v47 = vadd.s32 %v36, 88
    %v48 = vadd.s32 %v36, 96
    %v49 = vadd.s32 %v36, 104
    %v50 = vadd.s32 %v36, 112
    %v51 = vadd.s32 %v36, 120
    %v52 = vlaneseq
    %v53 = vshrl.u32 %v52, 7
    %v54 = vsub.s32 0, %v53
    %v55 = vrot.slane %v33, %v54
    %vm56 = vcmp.eq.s32.totalorder %v36, %v55
    %vm57 = vcmp.eq.s32.totalorder %v37, %v55
    %vm58 = vcmp.eq.s32.totalorder %v38, %v55
    %vm59 = vcmp.eq.s32.totalorder %v39, %v55
    %vm60 = vcmp.eq.s32.totalorder %v40, %v55
    %vm61 = vcmp.eq.s32.totalorder %v41, %v55
    %vm62 = vcmp.eq.s32.totalorder %v42, %v55
    %vm63 = vcmp.eq.s32.totalorder %v43, %v55
    %vm64 = vcmp.eq.s32.totalorder %v44, %v55
    %vm65 = vcmp.eq.s32.totalorder %v45, %v55
    %vm66 = vcmp.eq.s32.totalorder %v46, %v55
    %vm67 = vcmp.eq.s32.totalorder %v47, %v55
    %vm68 = vcmp.eq.s32.totalorder %v48, %v55
    %vm69 = vcmp.eq.s32.totalorder %v49, %v55
    %vm70 = vcmp.eq.s32.totalorder %v50, %v55
    %vm71 = vcmp.eq.s32.totalorder %v51, %v55
    %v72 = vsub.f32 1.0, %v34
    %v74 = vlaneseq
    %v75 = vshrl.u32 %v74, 7
    %v76 = vsub.s32 0, %v75
    %v77 = vrot.slane %v72, %v76
    %v79 = vsel %vm56, %v77, 0.0
    %v80 = vsel %vm57, %v77, 0.0
    %v81 = vsel %vm58, %v77, 0.0
    %v82 = vsel %vm59, %v77, 0.0
    %v83 = vsel %vm60, %v77, 0.0
    %v84 = vsel %vm61, %v77, 0.0
    %v85 = vsel %vm62, %v77, 0.0
    %v86 = vsel %vm63, %v77, 0.0
    %v87 = vsel %vm64, %v77, 0.0
    %v88 = vsel %vm65, %v77, 0.0
    %v89 = vsel %vm66, %v77, 0.0
    %v90 = vsel %vm67, %v77, 0.0
    %v91 = vsel %vm68, %v77, 0.0
    %v92 = vsel %vm69, %v77, 0.0
    %v93 = vsel %vm70, %v77, 0.0
    %v94 = vsel %vm71, %v77, 0.0
    %v95 = vadd.s32 %v33, 1
    %v96 = vlaneseq
    %v97 = vshrl.u32 %v96, 7
    %v98 = vsub.s32 0, %v97
    %v99 = vrot.slane %v95, %v98
    %vm100 = vcmp.eq.s32.totalorder %v36, %v99
    %vm101 = vcmp.eq.s32.totalorder %v37, %v99
    %vm102 = vcmp.eq.s32.totalorder %v38, %v99
    %vm103 = vcmp.eq.s32.totalorder %v39, %v99
    %vm104 = vcmp.eq.s32.totalorder %v40, %v99
    %vm105 = vcmp.eq.s32.totalorder %v41, %v99
    %vm106 = vcmp.eq.s32.totalorder %v42, %v99
    %vm107 = vcmp.eq.s32.totalorder %v43, %v99
    %vm108 = vcmp.eq.s32.totalorder %v44, %v99
    %vm109 = vcmp.eq.s32.totalorder %v45, %v99
    %vm110 = vcmp.eq.s32.totalorder %v46, %v99
    %vm111 = vcmp.eq.s32.totalorder %v47, %v99
    %vm112 = vcmp.eq.s32.totalorder %v48, %v99
    %vm113 = vcmp.eq.s32.totalorder %v49, %v99
    %vm114 = vcmp.eq.s32.totalorder %v50, %v99
    %vm115 = vcmp.eq.s32.totalorder %v51, %v99
    %v117 = vlaneseq
    %v118 = vshrl.u32 %v117, 7
    %v119 = vsub.s32 0, %v118
    %v120 = vrot.slane %v34, %v119
    %v122 = vsel %vm100, %v120, 0.0
    %v123 = vsel %vm101, %v120, 0.0
    %v124 = vsel %vm102, %v120, 0.0
    %v125 = vsel %vm103, %v120, 0.0
    %v126 = vsel %vm104, %v120, 0.0
    %v127 = vsel %vm105, %v120, 0.0
    %v128 = vsel %vm106, %v120, 0.0
    %v129 = vsel %vm107, %v120, 0.0
    %v130 = vsel %vm108, %v120, 0.0
    %v131 = vsel %vm109, %v120, 0.0
    %v132 = vsel %vm110, %v120, 0.0
    %v133 = vsel %vm111, %v120, 0.0
    %v134 = vsel %vm112, %v120, 0.0
    %v135 = vsel %vm113, %v120, 0.0
    %v136 = vsel %vm114, %v120, 0.0
    %v137 = vsel %vm115, %v120, 0.0
    %v138 = vadd.f32 %v79, %v122
    %v139 = vadd.f32 %v80, %v123
    %v140 = vadd.f32 %v81, %v124
    %v141 = vadd.f32 %v82, %v125
    %v142 = vadd.f32 %v83, %v126
    %v143 = vadd.f32 %v84, %v127
    %v144 = vadd.f32 %v85, %v128
    %v145 = vadd.f32 %v86, %v129
    %v146 = vadd.f32 %v87, %v130
    %v147 = vadd.f32 %v88, %v131
    %v148 = vadd.f32 %v89, %v132
    %v149 = vadd.f32 %v90, %v133
    %v150 = vadd.f32 %v91, %v134
    %v151 = vadd.f32 %v92, %v135
    %v152 = vadd.f32 %v93, %v136
    %v153 = vadd.f32 %v94, %v137
    %v154 = vld [vmem:[#allocation4] sm:$0xff]
    %155 = vmatprep.subr.mxu0 0.0
    %156 = vmatpush1.msra.mxu0 %v138
    %157 = vmatprep.subr.mxu0 0.0
    %158 = vmatpush1.msra.mxu0 %v139
    %159 = vmatprep.subr.mxu0 0.0
    %160 = vmatpush1.msra.mxu0 %v140
    %161 = vmatprep.subr.mxu0 0.0
    %162 = vmatpush1.msra.mxu0 %v141
    %163 = vmatprep.subr.mxu0 0.0
    %164 = vmatpush1.msra.mxu0 %v142
    %165 = vmatprep.subr.mxu0 0.0
    %166 = vmatpush1.msra.mxu0 %v143
    %167 = vmatprep.subr.mxu0 0.0
    %168 = vmatpush1.msra.mxu0 %v144
    %169 = vmatprep.subr.mxu0 0.0
    %170 = vmatpush1.msra.mxu0 %v145
    %171 = vmatprep.subr.mxu0 0.0
    %172 = vmatpush1.msra.mxu0 %v146
    %173 = vmatprep.subr.mxu0 0.0
    %174 = vmatpush1.msra.mxu0 %v147
    %175 = vmatprep.subr.mxu0 0.0
    %176 = vmatpush1.msra.mxu0 %v148
    %177 = vmatprep.subr.mxu0 0.0
    %178 = vmatpush1.msra.mxu0 %v149
    %179 = vmatprep.subr.mxu0 0.0
    %180 = vmatpush1.msra.mxu0 %v150
    %181 = vmatprep.subr.mxu0 0.0
    %182 = vmatpush1.msra.mxu0 %v151
    %183 = vmatprep.subr.mxu0 0.0
    %184 = vmatpush1.msra.mxu0 %v152
    %185 = vmatprep.subr.mxu0 0.0
    %186 = vmatpush1.msra.mxu0 %v153
    %187 = vmatprep.subr.mxu0 0.0
    %188 = vmatpush1.msra.mxu0 0.0
    %189 = vmatprep.subr.mxu0 0.0
    %190 = vmatpush1.msra.mxu0 0.0
    %191 = vmatprep.subr.mxu0 0.0
    %192 = vmatpush1.msra.mxu0 0.0
    %193 = vmatprep.subr.mxu0 0.0
    %194 = vmatpush1.msra.mxu0 0.0
    %195 = vmatprep.subr.mxu0 0.0
    %196 = vmatpush1.msra.mxu0 0.0
    %197 = vmatprep.subr.mxu0 0.0
    %198 = vmatpush1.msra.mxu0 0.0
    %199 = vmatprep.subr.mxu0 0.0
    %200 = vmatpush1.msra.mxu0 0.0
    %201 = vmatprep.subr.mxu0 0.0
    %202 = vmatpush1.msra.mxu0 0.0
    %203 = vmatprep.subr.mxu0 0.0
    %204 = vmatpush1.msra.mxu0 0.0
    %205 = vmatprep.subr.mxu0 0.0
    %206 = vmatpush1.msra.mxu0 0.0
    %207 = vmatprep.subr.mxu0 0.0
    %208 = vmatpush1.msra.mxu0 0.0
    %209 = vmatprep.subr.mxu0 0.0
    %210 = vmatpush1.msra.mxu0 0.0
    %211 = vmatprep.subr.mxu0 0.0
    %212 = vmatpush1.msra.mxu0 0.0
    %213 = vmatprep.subr.mxu0 0.0
    %214 = vmatpush1.msra.mxu0 0.0
    %215 = vmatprep.subr.mxu0 0.0
    %216 = vmatpush1.msra.mxu0 0.0
    %217 = vmatprep.subr.mxu0 0.0
    %218 = vmatpush1.msra.mxu0 0.0
    %219 = vmatprep.mubr.f32.mxu0 0.0
    %220 = vmatmul.mubr.f32.gmra.mrb[0].mxu0 %v154
    %v221 = vpop.f32.mrb[0].mxu0
    %v222 = vadd.f32 0.0, %v221
    %v223 = vpop.f32.mrb[0].mxu0
    %224 = vdwg.mxu0
    %225 = vst [vmem:[#allocation7] sm:$0xff] %v222
    // Predicated region
    $region18: #{tpu_custom_call.1} parent=1 // pred_check
      _
    $region19: #{tpu_custom_call.1} parent=1 // pred_check_branch
      %227 = sbr.rel (0) target = $region21
    $region20: #{tpu_custom_call.1} parent=1 // pred_region
      %s229 = ssub.s32 128, 128
      %230 = vsyncadd [#allocation6], %s229
      %s232 = sshll.u32 [#allocation7], 4
      %s233 = int_to_ptr.vmem [resolvable:$true] %s232
      %235 = dma.vmem_to_hbm [thread:$0]  %s233, 128, %s4, [#allocation6]
    $region21: #{tpu_custom_call.1} parent=1 // pred_fallthru
      _
    // Predicated region
    $region22: #{tpu_custom_call.1} parent=1 // pred_check
      _
    $region23: #{tpu_custom_call.1} parent=1 // pred_check_branch
      %237 = sbr.rel (0) target = $region25
    $region24: #{tpu_custom_call.1} parent=1 // pred_region
      %238 = dma.done [#allocation6], 128
    $region25: #{tpu_custom_call.1} parent=1 // pred_fallthru
      _
    %239 = vsyncpa [#allocation5], 1
    %240 = vsyncpa [#allocation6], 1

</llo_original>
